<compile_context>
chip_gen: v7x
topology: tpu7x:2x2x1
jax: 0.10.0
libtpu: 0.0.40
codegen_flags: <defaults>
</compile_context>

<pallas_src>
import functools

import jax
import jax.numpy as jnp
from jax.experimental import pallas as pl
from jax.experimental.pallas import tpu as pltpu

BN_EPS = 1e-5
LEAKY_SLOPE = 0.01  # nn.LeakyReLU default negative_slope


def _round_up(n, m):
    return -(-n // m) * m


# ----------------------------------------------------------------------------
# Fused kernel: whole MLP in one pallas_call
# ----------------------------------------------------------------------------
def _make_mlp_kernel(num_hidden, widths):
    """Build a fused-MLP kernel for a fixed number of hidden layers.

    Ref layout (positional):
      x_ref                              (TB, F_in)      f32   VMEM
      w0_ref ... w{L-1}_ref              (F_i, F_{i+1})  bf16  VMEM (BN folded)
      packed_ref                         (L+2, max_w)    f32   VMEM
          rows 0..L-1 : folded per-layer biases (zero padded to max_w)
          row  L      : final-layer weight row (zero padded)
          row  L+1    : [final bias, 0, ...]
      o_ref                              (TB, 1)         f32   VMEM
    """

    def kernel(*refs):
        x_ref = refs[0]
        packed_ref = refs[-2]
        o_ref = refs[-1]

        packed = packed_ref[...]          # tiny (L+2, max_w) f32 tile, loaded once
        h = x_ref[...]                    # (TB, F_in) f32

        # Python-unrolled layer loop: activations stay in vregs between layers.
        for i in range(num_hidden):
            w_ref = refs[1 + i]
            # bf16 MXU matmul with f32 accumulation.
            y = jnp.dot(h.astype(jnp.bfloat16), w_ref[...],
                        preferred_element_type=jnp.float32)
            y = y + packed[i:i + 1, :widths[i]]            # bias add (f32 VPU)
            # LeakyReLU (BatchNorm folded into w/b; Dropout = identity in eval)
            h = jnp.where(y >= 0.0, y, LEAKY_SLOPE * y)

        # Final Linear(F_last -> 1): VPU multiply + XLU lane-reduce
        # (deliberately NOT an N=1 MXU matmul).
        wf = packed[num_hidden:num_hidden + 1, :widths[-1]]    # (1, F_last)
        bf = packed[num_hidden + 1:num_hidden + 2, 0:1]        # (1, 1)
        o_ref[...] = jnp.sum(h * wf, axis=-1, keepdims=True) + bf

    return kernel


def mlp_forward(x, weights, packed, batch_tile=256):
    """Run the fused MLP. `weights` = BN-folded bf16 weights, `packed` = bias pack."""
    B, f_in = x.shape
    num_hidden = len(weights)
    widths = tuple(int(w.shape[1]) for w in weights)

    # Pick a batch tile: multiple of 16 (bf16 sublane tile); pad batch to it.
    tb = batch_tile
    if B <= tb:
        tb = max(16, _round_up(B, 16))
    b_pad = _round_up(B, tb)
    if b_pad != B:
        x = jnp.pad(x, ((0, b_pad - B), (0, 0)))
    grid = (b_pad // tb,)

    # x / output tiled over batch; weights + bias-pack resident (constant index_map).
    in_specs = [pl.BlockSpec((tb, f_in), lambda i: (i, 0))]
    for w in weights:
        in_specs.append(pl.BlockSpec(w.shape, lambda i: (0, 0)))
    in_specs.append(pl.BlockSpec(packed.shape, lambda i: (0, 0)))

    out = pl.pallas_call(
        _make_mlp_kernel(num_hidden, widths),
        out_shape=jax.ShapeDtypeStruct((b_pad, 1), jnp.float32),
        grid=grid,
        in_specs=in_specs,
        out_specs=pl.BlockSpec((tb, 1), lambda i: (i, 0)),
        compiler_params=pltpu.CompilerParams(
            dimension_semantics=("parallel",)),
    )(x, *weights, packed)
    return out[:B]


@functools.partial(jax.jit, static_argnames=("batch_tile",))
def forward(x, weights, packed, batch_tile=256):
    """Jitted forward over pre-folded parameters (no per-call BN folding)."""
    return mlp_forward(x, tuple(weights), packed, batch_tile)


# ----------------------------------------------------------------------------
# Parameter construction + one-time BN folding / packing
# ----------------------------------------------------------------------------
def init_params(key, in_features, num_hidden_layers, n_units_last):
    """Deterministic parameter init mirroring the PyTorch module's shapes."""
    if num_hidden_layers < 1 or num_hidden_layers > 4:
        raise ValueError("num_hidden_layers must be between 1 and 4")
    layer_sizes = [n_units_last * 2 ** i for i in reversed(range(num_hidden_layers))]

    params = []
    fan_in = in_features
    for size in layer_sizes:
        key, kw, kb, kg, kbt, km, kv = jax.random.split(key, 7)
        params.append(dict(
            # stored as (in, out) == PyTorch weight.T
            w=jax.random.normal(kw, (fan_in, size), jnp.float32) * 0.05,
            b=jax.random.normal(kb, (1, size), jnp.float32) * 0.05,
            gamma=1.0 + 0.1 * jax.random.normal(kg, (1, size), jnp.float32),
            beta=0.1 * jax.random.normal(kbt, (1, size), jnp.float32),
            mean=0.1 * jax.random.normal(km, (1, size), jnp.float32),
            var=jnp.abs(1.0 + 0.1 * jax.random.normal(kv, (1, size), jnp.float32)),
        ))
        fan_in = size

    key, kw, kb = jax.random.split(key, 3)
    final = dict(
        w=jax.random.normal(kw, (fan_in, 1), jnp.float32) * 0.05,
        b=jax.random.normal(kb, (1, 1), jnp.float32) * 0.05,
    )
    return params, final


def prepare_params(params, final):
    """One-time prep: fold eval-mode BatchNorm into Linear, cast weights to bf16,
    and pack all biases + the final weight row + final bias into one operand.

      scale = gamma / sqrt(var + eps)
      w'    = w * scale                      (per output column)
      b'    = (b - mean) * scale + beta
    """
    weights = []
    biases = []
    for p in params:
        scale = p["gamma"] * jax.lax.rsqrt(p["var"] + BN_EPS)      # (1, Fout)
        weights.append((p["w"] * scale).astype(jnp.bfloat16))      # (Fin, Fout) bf16
        biases.append((p["b"] - p["mean"]) * scale + p["beta"])    # (1, Fout) f32

    widths = [int(w.shape[1]) for w in weights]
    max_w = max(widths)
    num_hidden = len(weights)

    packed = jnp.zeros((num_hidden + 2, max_w), jnp.float32)
    for i, b in enumerate(biases):
        packed = packed.at[i, :widths[i]].set(b[0])
    wf_row = jnp.transpose(final["w"])[0].astype(jnp.float32)       # (F_last,)
    packed = packed.at[num_hidden, :widths[-1]].set(wf_row)
    packed = packed.at[num_hidden + 1, 0].set(final["b"][0, 0])
    return weights, packed


# ----------------------------------------------------------------------------
# References (pure JAX) for sanity checks
# ----------------------------------------------------------------------------
def forward_ref_f32(x, params, final):
    """Un-folded, full-f32 reference of the original module (eval mode)."""
    for p in params:
        y = x @ p["w"] + p["b"]
        y = (y - p["mean"]) / jnp.sqrt(p["var"] + BN_EPS) * p["gamma"] + p["beta"]
        x = jnp.where(y >= 0, y, LEAKY_SLOPE * y)
    return x @ final["w"] + final["b"]


def forward_ref_folded(x, weights, packed):
    """Pure-JAX mirror of the kernel math (same folded bf16 params)."""
    num_hidden = len(weights)
    widths = [int(w.shape[1]) for w in weights]
    h = x
    for i, w in enumerate(weights):
        y = jnp.dot(h.astype(jnp.bfloat16), w, preferred_element_type=jnp.float32)
        y = y + packed[i:i + 1, :widths[i]]
        h = jnp.where(y >= 0.0, y, LEAKY_SLOPE * y)
    wf = packed[num_hidden:num_hidden + 1, :widths[-1]]
    bf = packed[num_hidden + 1, 0]
    return jnp.sum(h * wf, axis=-1, keepdims=True) + bf


if __name__ == "__main__":
    key = jax.random.PRNGKey(0)
    k_x, k_p, k_x2 = jax.random.split(key, 3)

    batch = 8
    in_features = 16
    num_hidden_layers = 3
    n_units_last = 32       # -> layer sizes [128, 64, 32]
    dropout_rate = 0.1      # identity in eval mode

    x = jax.random.normal(k_x, (batch, in_features), jnp.float32)
    params, final = init_params(k_p, in_features, num_hidden_layers, n_units_last)

    # BN folding + packing done ONCE at model-load time (not inside forward()).
    weights, packed = prepare_params(params, final)
    weights = jax.block_until_ready(weights)
    packed = jax.block_until_ready(packed)

    # Small-batch run (grid of 1, batch padded 8 -> 16).
    out = jax.block_until_ready(forward(x, weights, packed))
    assert out.shape == (batch, 1), out.shape
    ref_folded = forward_ref_folded(x, weights, packed)
    assert jnp.allclose(out, ref_folded, atol=1e-3, rtol=1e-3), (out, ref_folded)
    ref_f32 = forward_ref_f32(x, params, final)
    assert jnp.allclose(out, ref_f32, atol=5e-2, rtol=5e-2), (out, ref_f32)

    # Larger batch exercising the parallel batch grid (2 tiles of 256 rows).
    x2 = jax.random.normal(k_x2, (512, in_features), jnp.float32)
    out2 = jax.block_until_ready(forward(x2, weights, packed))
    assert out2.shape == (512, 1), out2.shape
    ref2 = forward_ref_folded(x2, weights, packed)
    assert jnp.allclose(out2, ref2, atol=1e-3, rtol=1e-3)

    print("KERNEL_OK")
</pallas_src>

<mosaic_0001>
module attributes {stable_mosaic.version = 11 : i64} {
  func.func @kernel(%arg0: i32, %arg1: memref<16x16xf32, #tpu.memory_space<vmem>>, %arg2: memref<16x128xbf16, #tpu.memory_space<vmem>>, %arg3: memref<128x64xbf16, #tpu.memory_space<vmem>>, %arg4: memref<64x32xbf16, #tpu.memory_space<vmem>>, %arg5: memref<5x128xf32, #tpu.memory_space<vmem>>, %arg6: memref<16x1xf32, #tpu.memory_space<vmem>>) attributes {dimension_semantics = [#tpu.dimension_semantics<parallel>], iteration_bounds = array<i64: 1>, scalar_prefetch = 0 : i64, scratch_operands = 0 : i64, tpu.core_type = #tpu.core_type<tc>, window_params = [{transform_indices = @transform_0, window_bounds = array<i64: 16, 16>}, {pipeline_mode = #tpu.pipeline_mode<synchronous>, transform_indices = @transform_1, window_bounds = array<i64: 16, 128>}, {pipeline_mode = #tpu.pipeline_mode<synchronous>, transform_indices = @transform_2, window_bounds = array<i64: 128, 64>}, {pipeline_mode = #tpu.pipeline_mode<synchronous>, transform_indices = @transform_3, window_bounds = array<i64: 64, 32>}, {pipeline_mode = #tpu.pipeline_mode<synchronous>, transform_indices = @transform_4, window_bounds = array<i64: 5, 128>}, {transform_indices = @transform_5, window_bounds = array<i64: 16, 1>}]} {
    %c0 = arith.constant 0 : index
    %c0_0 = arith.constant 0 : index
    %0 = vector.load %arg5[%c0, %c0_0] : memref<5x128xf32, #tpu.memory_space<vmem>>, vector<5x128xf32>
    %c0_1 = arith.constant 0 : index
    %c0_2 = arith.constant 0 : index
    %1 = vector.load %arg1[%c0_1, %c0_2] : memref<16x16xf32, #tpu.memory_space<vmem>>, vector<16x16xf32>
    %2 = arith.truncf %1 : vector<16x16xf32> to vector<16x16xbf16>
    %c0_3 = arith.constant 0 : index
    %c0_4 = arith.constant 0 : index
    %3 = vector.load %arg2[%c0_3, %c0_4] : memref<16x128xbf16, #tpu.memory_space<vmem>>, vector<16x128xbf16>
    %cst = arith.constant dense<0.000000e+00> : vector<16x128xf32>
    %4 = tpu.matmul %2, %3, %cst {dimension_numbers = #tpu.dot_dimension_numbers<[1], [0], [0], [1], [0, 0, 1, 1], [], []>} : vector<16x16xbf16>, vector<16x128xbf16>, vector<16x128xf32> -> vector<16x128xf32>
    %5 = vector.extract_strided_slice %0 {offsets = [0, 0], sizes = [1, 128], strides = [1, 1]} : vector<5x128xf32> to vector<1x128xf32>
    %6 = vector.broadcast %5 : vector<1x128xf32> to vector<16x128xf32>
    %7 = arith.addf %4, %6 : vector<16x128xf32>
    %cst_5 = arith.constant 0.000000e+00 : f32
    %8 = vector.broadcast %cst_5 : f32 to vector<16x128xf32>
    %9 = arith.cmpf oge, %7, %8 : vector<16x128xf32>
    %cst_6 = arith.constant 0.00999999977 : f32
    %10 = vector.broadcast %cst_6 : f32 to vector<16x128xf32>
    %11 = arith.mulf %10, %7 : vector<16x128xf32>
    %12 = arith.select %9, %7, %11 : vector<16x128xi1>, vector<16x128xf32>
    %13 = arith.truncf %12 : vector<16x128xf32> to vector<16x128xbf16>
    %c0_7 = arith.constant 0 : index
    %c0_8 = arith.constant 0 : index
    %14 = vector.load %arg3[%c0_7, %c0_8] : memref<128x64xbf16, #tpu.memory_space<vmem>>, vector<128x64xbf16>
    %cst_9 = arith.constant dense<0.000000e+00> : vector<16x64xf32>
    %15 = tpu.matmul %13, %14, %cst_9 {dimension_numbers = #tpu.dot_dimension_numbers<[1], [0], [0], [1], [0, 0, 1, 1], [], []>} : vector<16x128xbf16>, vector<128x64xbf16>, vector<16x64xf32> -> vector<16x64xf32>
    %16 = vector.extract_strided_slice %0 {offsets = [1, 0], sizes = [1, 64], strides = [1, 1]} : vector<5x128xf32> to vector<1x64xf32>
    %17 = vector.broadcast %16 : vector<1x64xf32> to vector<16x64xf32>
    %18 = arith.addf %15, %17 : vector<16x64xf32>
    %cst_10 = arith.constant 0.000000e+00 : f32
    %19 = vector.broadcast %cst_10 : f32 to vector<16x64xf32>
    %20 = arith.cmpf oge, %18, %19 : vector<16x64xf32>
    %cst_11 = arith.constant 0.00999999977 : f32
    %21 = vector.broadcast %cst_11 : f32 to vector<16x64xf32>
    %22 = arith.mulf %21, %18 : vector<16x64xf32>
    %23 = arith.select %20, %18, %22 : vector<16x64xi1>, vector<16x64xf32>
    %24 = arith.truncf %23 : vector<16x64xf32> to vector<16x64xbf16>
    %c0_12 = arith.constant 0 : index
    %c0_13 = arith.constant 0 : index
    %25 = vector.load %arg4[%c0_12, %c0_13] : memref<64x32xbf16, #tpu.memory_space<vmem>>, vector<64x32xbf16>
    %cst_14 = arith.constant dense<0.000000e+00> : vector<16x32xf32>
    %26 = tpu.matmul %24, %25, %cst_14 {dimension_numbers = #tpu.dot_dimension_numbers<[1], [0], [0], [1], [0, 0, 1, 1], [], []>} : vector<16x64xbf16>, vector<64x32xbf16>, vector<16x32xf32> -> vector<16x32xf32>
    %27 = vector.extract_strided_slice %0 {offsets = [2, 0], sizes = [1, 32], strides = [1, 1]} : vector<5x128xf32> to vector<1x32xf32>
    %28 = vector.broadcast %27 : vector<1x32xf32> to vector<16x32xf32>
    %29 = arith.addf %26, %28 : vector<16x32xf32>
    %cst_15 = arith.constant 0.000000e+00 : f32
    %30 = vector.broadcast %cst_15 : f32 to vector<16x32xf32>
    %31 = arith.cmpf oge, %29, %30 : vector<16x32xf32>
    %cst_16 = arith.constant 0.00999999977 : f32
    %32 = vector.broadcast %cst_16 : f32 to vector<16x32xf32>
    %33 = arith.mulf %32, %29 : vector<16x32xf32>
    %34 = arith.select %31, %29, %33 : vector<16x32xi1>, vector<16x32xf32>
    %35 = vector.extract_strided_slice %0 {offsets = [3, 0], sizes = [1, 32], strides = [1, 1]} : vector<5x128xf32> to vector<1x32xf32>
    %36 = vector.extract_strided_slice %0 {offsets = [4, 0], sizes = [1, 1], strides = [1, 1]} : vector<5x128xf32> to vector<1x1xf32>
    %37 = vector.broadcast %35 : vector<1x32xf32> to vector<16x32xf32>
    %38 = arith.mulf %34, %37 : vector<16x32xf32>
    %cst_17 = arith.constant dense<0.000000e+00> : vector<16xf32>
    %39 = vector.multi_reduction <add>, %38, %cst_17 [1] : vector<16x32xf32> to vector<16xf32>
    %40 = vector.shape_cast %39 : vector<16xf32> to vector<16x1xf32>
    %41 = vector.broadcast %36 : vector<1x1xf32> to vector<16x1xf32>
    %42 = arith.addf %40, %41 : vector<16x1xf32>
    %c0_18 = arith.constant 0 : index
    %c0_19 = arith.constant 0 : index
    %43 = vector.load %arg6[%c0_18, %c0_19] : memref<16x1xf32, #tpu.memory_space<vmem>>, vector<16x1xf32>
    tpu.vector_store %arg6[%c0_18, %c0_19], %42 {strides = array<i32>} : memref<16x1xf32, #tpu.memory_space<vmem>>, vector<16x1xf32>,
    return
  }
  func.func @transform_0(%arg0: i32) -> (i32, i32) {
    %c0_i32 = arith.constant 0 : i32
    %c0_i32_0 = arith.constant 0 : i32
    return %arg0, %c0_i32 : i32, i32
  }
  func.func @transform_1(%arg0: i32) -> (i32, i32) {
    %c0_i32 = arith.constant 0 : i32
    %c0_i32_0 = arith.constant 0 : i32
    %c0_i32_1 = arith.constant 0 : i32
    return %c0_i32, %c0_i32_0 : i32, i32
  }
  func.func @transform_2(%arg0: i32) -> (i32, i32) {
    %c0_i32 = arith.constant 0 : i32
    %c0_i32_0 = arith.constant 0 : i32
    %c0_i32_1 = arith.constant 0 : i32
    return %c0_i32, %c0_i32_0 : i32, i32
  }
  func.func @transform_3(%arg0: i32) -> (i32, i32) {
    %c0_i32 = arith.constant 0 : i32
    %c0_i32_0 = arith.constant 0 : i32
    %c0_i32_1 = arith.constant 0 : i32
    return %c0_i32, %c0_i32_0 : i32, i32
  }
  func.func @transform_4(%arg0: i32) -> (i32, i32) {
    %c0_i32 = arith.constant 0 : i32
    %c0_i32_0 = arith.constant 0 : i32
    %c0_i32_1 = arith.constant 0 : i32
    return %c0_i32, %c0_i32_0 : i32, i32
  }
  func.func @transform_5(%arg0: i32) -> (i32, i32) {
    %c0_i32 = arith.constant 0 : i32
    %c0_i32_0 = arith.constant 0 : i32
    return %arg0, %c0_i32 : i32, i32
  }
}

</mosaic_0001>

<llo_original>
// kernel: forward.1
$region0: #{forward.1}
  #allocation0 [shape = 'u32[]', space=smem, size = 0x4, offset = 0x4, fixed_abs, tag = 'smem constant byte address 0x4 - core index']
  #allocation1 [shape = 'u32[144,128]{1,0:T(1,128)}', space=vmem, size = 0x12000, scoped, tag = 'internal scratch']
  %s0 = inlined_call_operand.vmem [shape: f32[16,16], index: 0, kind: input, shape index: {}]
  %s1 = inlined_call_operand.vmem [shape: bf16[16,128], index: 1, kind: input, shape index: {}]
  %s2 = inlined_call_operand.vmem [shape: bf16[128,64], index: 2, kind: input, shape index: {}]
  %s3 = inlined_call_operand.vmem [shape: bf16[64,32], index: 3, kind: input, shape index: {}]
  %s4 = inlined_call_operand.vmem [shape: f32[5,128], index: 4, kind: input, shape index: {}]
  %s5 = inlined_call_operand.vmem [shape: f32[16,1], index: 5, kind: output, shape index: {}]
  %s6 = sld [smem:[#allocation0]]
  $region30: #{forward.1} parent=0
    _
  %s8 = ssub.s32 1, %s6
  %s9 = scalar_select 0, %s8, %s6
  // Predicated region
  $region2: #{forward.1} parent=0 // pred_check
    _
  $region3: #{forward.1} parent=0 // pred_check_branch
    %11 = sbr.rel (0) target = $region5
  $region4: #{forward.1} parent=0 // pred_region
    _
  $region5: #{forward.1} parent=0 // pred_fallthru
    _
  // Predicated region
  $region6: #{forward.1} parent=0 // pred_check
    _
  $region7: #{forward.1} parent=0 // pred_check_branch
    %13 = sbr.rel (0) target = $region9
  $region8: #{forward.1} parent=0 // pred_region
    _
  $region9: #{forward.1} parent=0 // pred_fallthru
    _
  // Predicated region
  $region10: #{forward.1} parent=0 // pred_check
    _
  $region11: #{forward.1} parent=0 // pred_check_branch
    %15 = sbr.rel (0) target = $region13
  $region12: #{forward.1} parent=0 // pred_region
    _
  $region13: #{forward.1} parent=0 // pred_fallthru
    _
  // Predicated region
  $region14: #{forward.1} parent=0 // pred_check
    _
  $region15: #{forward.1} parent=0 // pred_check_branch
    %17 = sbr.rel (0) target = $region17
  $region16: #{forward.1} parent=0 // pred_region
    _
  $region17: #{forward.1} parent=0 // pred_fallthru
    _
  // Predicated region
  $region18: #{forward.1} parent=0 // pred_check
    _
  $region19: #{forward.1} parent=0 // pred_check_branch
    %19 = sbr.rel (0) target = $region21
  $region20: #{forward.1} parent=0 // pred_region
    _
  $region21: #{forward.1} parent=0 // pred_fallthru
    _
  %v21 = vld [vmem:[%s4] sm:$0x1f]
  %v22 = vld [vmem:[%s0] sm:$0xff]
  %v23 = vld [vmem:[%s0 + $0x8] sm:$0xff]
  %v24 = vpack.c.bf16 %v23, %v22
  %v25 = vld [vmem:[%s1] sm:$0xf]
  %v26 = vld [vmem:[%s1 + $0x4] sm:$0xf]
  %v27 = vlaneseq
  %v28 = vshrl.u32 %v27, 7
  %v29 = vsub.s32 0, %v28
  %v30 = vrot.slane %v21, %v29
  %v33 = vunpack.c.l.b16 %v25
  %v34 = vunpack.c.l.b16 %v26
  %v35 = vpack.c.b16 %v34, %v33
  %vm37 = vcmask 130048
  %v39 = vsel %vm37, %v24, 0
  %41 = vmatprep.subr.bf16.mxu0 0
  %42 = vmatpush1.bf16.msra.mxu0 %v35
  %43 = vmatprep.subr.bf16.mxu0 0
  %44 = vmatpush1.bf16.msra.mxu0 0
  %45 = vmatprep.subr.bf16.mxu0 0
  %46 = vmatpush1.bf16.msra.mxu0 0
  %47 = vmatprep.subr.bf16.mxu0 0
  %48 = vmatpush1.bf16.msra.mxu0 0
  %49 = vmatprep.subr.bf16.mxu0 0
  %50 = vmatpush1.bf16.msra.mxu0 0
  %51 = vmatprep.subr.bf16.mxu0 0
  %52 = vmatpush1.bf16.msra.mxu0 0
  %53 = vmatprep.subr.bf16.mxu0 0
  %54 = vmatpush1.bf16.msra.mxu0 0
  %55 = vmatprep.subr.bf16.mxu0 0
  %56 = vmatpush1.bf16.msra.mxu0 0
  %57 = vmatprep.subr.bf16.mxu0 0
  %58 = vmatpush1.bf16.msra.mxu0 0
  %59 = vmatprep.subr.bf16.mxu0 0
  %60 = vmatpush1.bf16.msra.mxu0 0
  %61 = vmatprep.subr.bf16.mxu0 0
  %62 = vmatpush1.bf16.msra.mxu0 0
  %63 = vmatprep.subr.bf16.mxu0 0
  %64 = vmatpush1.bf16.msra.mxu0 0
  %65 = vmatprep.subr.bf16.mxu0 0
  %66 = vmatpush1.bf16.msra.mxu0 0
  %67 = vmatprep.subr.bf16.mxu0 0
  %68 = vmatpush1.bf16.msra.mxu0 0
  %69 = vmatprep.subr.bf16.mxu0 0
  %70 = vmatpush1.bf16.msra.mxu0 0
  %71 = vmatprep.subr.bf16.mxu0 0
  %72 = vmatpush1.bf16.msra.mxu0 0
  %73 = vmatprep.mubr.bf16.mxu0 0
  %74 = vmatmul.mubr.bf16.gmra.mrb[0].mxu0 %v39
  %v75 = vpop.f32.mrb[0].mxu0
  %v76 = vadd.f32 %v30, %v75
  %v77 = vpop.f32.mrb[0].mxu0
  %v78 = vpop.f32.mrb[0].mxu0
  %v79 = vadd.f32 %v30, %v78
  %v80 = vpop.f32.mrb[0].mxu0
  %81 = vdwg.mxu0
  %vm82 = vcmp.ge.f32.partialorder %v76, 0.0
  %vm83 = vcmp.ge.f32.partialorder %v79, 0.0
  %v84 = vmul.f32 %v76, 0.01
  %v85 = vmul.f32 %v79, 0.01
  %v86 = vsel %vm82, %v76, %v84
  %v87 = vsel %vm83, %v79, %v85
  %v88 = vpack.c.bf16 %v87, %v86
  %v89 = vld [vmem:[%s2] sm:$0xf]
  %v90 = vld [vmem:[%s2 + $0x4] sm:$0xf]
  %v91 = vld [vmem:[%s2 + $0x8] sm:$0xf]
  %v92 = vld [vmem:[%s2 + $0xc] sm:$0xf]
  %v93 = vld [vmem:[%s2 + $0x10] sm:$0xf]
  %v94 = vld [vmem:[%s2 + $0x14] sm:$0xf]
  %v95 = vld [vmem:[%s2 + $0x18] sm:$0xf]
  %v96 = vld [vmem:[%s2 + $0x1c] sm:$0xf]
  %v97 = vld [vmem:[%s2 + $0x20] sm:$0xf]
  %v98 = vld [vmem:[%s2 + $0x24] sm:$0xf]
  %v99 = vld [vmem:[%s2 + $0x28] sm:$0xf]
  %v100 = vld [vmem:[%s2 + $0x2c] sm:$0xf]
  %v101 = vld [vmem:[%s2 + $0x30] sm:$0xf]
  %v102 = vld [vmem:[%s2 + $0x34] sm:$0xf]
  %v103 = vld [vmem:[%s2 + $0x38] sm:$0xf]
  %v104 = vld [vmem:[%s2 + $0x3c] sm:$0xf]
  %v105 = vlaneseq
  %v106 = vshrl.u32 %v105, 7
  %v107 = vsub.s32 1, %v106
  %v108 = vrot.slane %v21, %v107
  %v125 = vunpack.c.l.b16 %v89
  %v126 = vunpack.c.l.b16 %v90
  %v127 = vunpack.c.l.b16 %v91
  %v128 = vunpack.c.l.b16 %v92
  %v129 = vunpack.c.l.b16 %v93
  %v130 = vunpack.c.l.b16 %v94
  %v131 = vunpack.c.l.b16 %v95
  %v132 = vunpack.c.l.b16 %v96
  %v133 = vunpack.c.l.b16 %v97
  %v134 = vunpack.c.l.b16 %v98
  %v135 = vunpack.c.l.b16 %v99
  %v136 = vunpack.c.l.b16 %v100
  %v137 = vunpack.c.l.b16 %v101
  %v138 = vunpack.c.l.b16 %v102
  %v139 = vunpack.c.l.b16 %v103
  %v140 = vunpack.c.l.b16 %v104
  %v141 = vpack.c.b16 %v126, %v125
  %v142 = vpack.c.b16 %v128, %v127
  %v143 = vpack.c.b16 %v130, %v129
  %v144 = vpack.c.b16 %v132, %v131
  %v145 = vpack.c.b16 %v134, %v133
  %v146 = vpack.c.b16 %v136, %v135
  %v147 = vpack.c.b16 %v138, %v137
  %v148 = vpack.c.b16 %v140, %v139
  %157 = vmatprep.subr.bf16.mxu0 0
  %158 = vmatpush1.bf16.msra.mxu0 %v141
  %159 = vmatprep.subr.bf16.mxu0 0
  %160 = vmatpush1.bf16.msra.mxu0 %v142
  %161 = vmatprep.subr.bf16.mxu0 0
  %162 = vmatpush1.bf16.msra.mxu0 %v143
  %163 = vmatprep.subr.bf16.mxu0 0
  %164 = vmatpush1.bf16.msra.mxu0 %v144
  %165 = vmatprep.subr.bf16.mxu0 0
  %166 = vmatpush1.bf16.msra.mxu0 %v145
  %167 = vmatprep.subr.bf16.mxu0 0
  %168 = vmatpush1.bf16.msra.mxu0 %v146
  %169 = vmatprep.subr.bf16.mxu0 0
  %170 = vmatpush1.bf16.msra.mxu0 %v147
  %171 = vmatprep.subr.bf16.mxu0 0
  %172 = vmatpush1.bf16.msra.mxu0 %v148
  %173 = vmatprep.subr.bf16.mxu0 0
  %174 = vmatpush1.bf16.msra.mxu0 0
  %175 = vmatprep.subr.bf16.mxu0 0
  %176 = vmatpush1.bf16.msra.mxu0 0
  %177 = vmatprep.subr.bf16.mxu0 0
  %178 = vmatpush1.bf16.msra.mxu0 0
  %179 = vmatprep.subr.bf16.mxu0 0
  %180 = vmatpush1.bf16.msra.mxu0 0
  %181 = vmatprep.subr.bf16.mxu0 0
  %182 = vmatpush1.bf16.msra.mxu0 0
  %183 = vmatprep.subr.bf16.mxu0 0
  %184 = vmatpush1.bf16.msra.mxu0 0
  %185 = vmatprep.subr.bf16.mxu0 0
  %186 = vmatpush1.bf16.msra.mxu0 0
  %187 = vmatprep.subr.bf16.mxu0 0
  %188 = vmatpush1.bf16.msra.mxu0 0
  %189 = vmatprep.mubr.bf16.mxu0 0
  %190 = vmatmul.mubr.bf16.gmra.mrb[0].mxu0 %v88
  %v191 = vpop.f32.mrb[0].mxu0
  %v192 = vadd.f32 %v108, %v191
  %v193 = vpop.f32.mrb[0].mxu0
  %v194 = vpop.f32.mrb[0].mxu0
  %v195 = vadd.f32 %v108, %v194
  %v196 = vpop.f32.mrb[0].mxu0
  %197 = vdwg.mxu0
  %vm198 = vcmp.ge.f32.partialorder %v192, 0.0
  %vm199 = vcmp.ge.f32.partialorder %v195, 0.0
  %v200 = vmul.f32 %v192, 0.01
  %v201 = vmul.f32 %v195, 0.01
  %v202 = vsel %vm198, %v192, %v200
  %v203 = vsel %vm199, %v195, %v201
  %v204 = vpack.c.bf16 %v203, %v202
  %v205 = vld [vmem:[%s3] sm:$0xf]
  %v206 = vld [vmem:[%s3 + $0x4] sm:$0xf]
  %v207 = vld [vmem:[%s3 + $0x8] sm:$0xf]
  %v208 = vld [vmem:[%s3 + $0xc] sm:$0xf]
  %v209 = vld [vmem:[%s3 + $0x10] sm:$0xf]
  %v210 = vld [vmem:[%s3 + $0x14] sm:$0xf]
  %v211 = vld [vmem:[%s3 + $0x18] sm:$0xf]
  %v212 = vld [vmem:[%s3 + $0x1c] sm:$0xf]
  %v213 = vlaneseq
  %v214 = vshrl.u32 %v213, 7
  %v215 = vsub.s32 2, %v214
  %v216 = vrot.slane %v21, %v215
  %v225 = vunpack.c.l.b16 %v205
  %v226 = vunpack.c.l.b16 %v206
  %v227 = vunpack.c.l.b16 %v207
  %v228 = vunpack.c.l.b16 %v208
  %v229 = vunpack.c.l.b16 %v209
  %v230 = vunpack.c.l.b16 %v210
  %v231 = vunpack.c.l.b16 %v211
  %v232 = vunpack.c.l.b16 %v212
  %v233 = vpack.c.b16 %v226, %v225
  %v234 = vpack.c.b16 %v228, %v227
  %v235 = vpack.c.b16 %v230, %v229
  %v236 = vpack.c.b16 %v232, %v231
  %vm241 = vcmask 523264
  %v243 = vsel %vm241, %v204, 0
  %245 = vmatprep.subr.bf16.mxu0 0
  %246 = vmatpush1.bf16.msra.mxu0 %v233
  %247 = vmatprep.subr.bf16.mxu0 0
  %248 = vmatpush1.bf16.msra.mxu0 %v234
  %249 = vmatprep.subr.bf16.mxu0 0
  %250 = vmatpush1.bf16.msra.mxu0 %v235
  %251 = vmatprep.subr.bf16.mxu0 0
  %252 = vmatpush1.bf16.msra.mxu0 %v236
  %253 = vmatprep.subr.bf16.mxu0 0
  %254 = vmatpush1.bf16.msra.mxu0 0
  %255 = vmatprep.subr.bf16.mxu0 0
  %256 = vmatpush1.bf16.msra.mxu0 0
  %257 = vmatprep.subr.bf16.mxu0 0
  %258 = vmatpush1.bf16.msra.mxu0 0
  %259 = vmatprep.subr.bf16.mxu0 0
  %260 = vmatpush1.bf16.msra.mxu0 0
  %261 = vmatprep.subr.bf16.mxu0 0
  %262 = vmatpush1.bf16.msra.mxu0 0
  %263 = vmatprep.subr.bf16.mxu0 0
  %264 = vmatpush1.bf16.msra.mxu0 0
  %265 = vmatprep.subr.bf16.mxu0 0
  %266 = vmatpush1.bf16.msra.mxu0 0
  %267 = vmatprep.subr.bf16.mxu0 0
  %268 = vmatpush1.bf16.msra.mxu0 0
  %269 = vmatprep.subr.bf16.mxu0 0
  %270 = vmatpush1.bf16.msra.mxu0 0
  %271 = vmatprep.subr.bf16.mxu0 0
  %272 = vmatpush1.bf16.msra.mxu0 0
  %273 = vmatprep.subr.bf16.mxu0 0
  %274 = vmatpush1.bf16.msra.mxu0 0
  %275 = vmatprep.subr.bf16.mxu0 0
  %276 = vmatpush1.bf16.msra.mxu0 0
  %277 = vmatprep.mubr.bf16.mxu0 0
  %278 = vmatmul.mubr.bf16.gmra.mrb[0].mxu0 %v243
  %v279 = vpop.f32.mrb[0].mxu0
  %v280 = vadd.f32 %v216, %v279
  %v281 = vpop.f32.mrb[0].mxu0
  %v282 = vpop.f32.mrb[0].mxu0
  %v283 = vadd.f32 %v216, %v282
  %v284 = vpop.f32.mrb[0].mxu0
  %285 = vdwg.mxu0
  %vm286 = vcmp.ge.f32.partialorder %v280, 0.0
  %vm287 = vcmp.ge.f32.partialorder %v283, 0.0
  %v288 = vmul.f32 %v280, 0.01
  %v289 = vmul.f32 %v283, 0.01
  %v290 = vsel %vm286, %v280, %v288
  %v291 = vsel %vm287, %v283, %v289
  %v292 = vlaneseq
  %v293 = vshrl.u32 %v292, 7
  %v294 = vsub.s32 3, %v293
  %v295 = vrot.slane %v21, %v294
  %v296 = vmul.f32 %v290, %v295
  %v297 = vmul.f32 %v291, %v295
  %vm298 = vcmask 261120
  %v299 = vsel %vm298, %v296, 0.0
  %300 = vadd.xlane.f32.xlu0 %v299
  %v301 = vpop.xlane.xlu0 %300
  %v302 = vsel %vm298, %v297, 0.0
  %303 = vadd.xlane.f32.xlu0 %v302
  %v304 = vpop.xlane.xlu0 %303
  %v305 = vlaneseq
  %v306 = vshrl.u32 %v305, 7
  %v307 = vsub.s32 4, %v306
  %v308 = vrot.slane %v21, %v307
  %v309 = vadd.f32 %v301, %v308
  %v310 = vadd.f32 %v304, %v308
  %vm311 = vcmask 7168
  %312 = vst.msk [vmem:[%s5] sm:$0xff] %vm311, %v309
  %313 = vst.msk [vmem:[%s5 + $0x8] sm:$0xff] %vm311, %v310
  // Predicated region
  $region22: #{forward.1} parent=0 // pred_check
    _
  $region23: #{forward.1} parent=0 // pred_check_branch
    %315 = sbr.rel (0) target = $region25
  $region24: #{forward.1} parent=0 // pred_region
    _
  $region25: #{forward.1} parent=0 // pred_fallthru
    _
  // Predicated region
  $region26: #{forward.1} parent=0 // pred_check
    _
  $region27: #{forward.1} parent=0 // pred_check_branch
    %317 = sbr.rel (0) target = $region29
  $region28: #{forward.1} parent=0 // pred_region
    _
  $region29: #{forward.1} parent=0 // pred_fallthru
    _

</llo_original>
